<compile_context>
chip_gen: v6e
topology: v6e:2x2x1
jax: 0.10.0
libtpu: 0.0.40
codegen_flags: <defaults>
</compile_context>

<pallas_src>
import jax
import jax.numpy as jnp
from jax.experimental import pallas as pl
from jax.experimental.pallas import tpu as pltpu


def _actor_kernel(ar_ref, x_ref, w1_ref, b1_ref, w2_ref, b2_ref, w3_ref, b3_ref,
                  out_ref):
    # One (TILE_B, state_dim) tile of the batch; weights live in VMEM across steps.
    x = x_ref[...]
    h = jnp.dot(x, w1_ref[...], preferred_element_type=jnp.float32) + b1_ref[...]
    h = jnp.maximum(h, 0.0)                                   # relu
    h = jnp.dot(h, w2_ref[...], preferred_element_type=jnp.float32) + b2_ref[...]
    h = jnp.maximum(h, 0.0)                                   # relu
    h = jnp.dot(h, w3_ref[...], preferred_element_type=jnp.float32) + b3_ref[...]
    out_ref[...] = (jnp.tanh(h) * ar_ref[0, 0]).astype(out_ref.dtype)


def _round_up(x, m):
    return ((x + m - 1) // m) * m


def actor_forward(state, params, action_range, *, tile_b=512):
    """state: (B, state_dim) f32. params: dict of w1,b1,w2,b2,w3,b3 (W as (in, out))."""
    w1, b1 = params["w1"], params["b1"]
    w2, b2 = params["w2"], params["b2"]
    w3, b3 = params["w3"], params["b3"]
    B, state_dim = state.shape
    action_dim = w3.shape[1]

    # Batch tile: multiple of 8 (f32 sublane), capped at tile_b, no larger than padded batch.
    tb = min(tile_b, _round_up(B, 8))
    tb = max(8, (tb // 8) * 8)
    Bp = _round_up(B, tb)
    x = state if Bp == B else jnp.pad(state, ((0, Bp - B), (0, 0)))

    # action_range as an SMEM scalar -> no recompilation when it changes.
    ar = jnp.asarray(action_range, jnp.float32).reshape(1, 1)

    # Weights/biases: full-array blocks with constant index_map -> VMEM-resident across steps.
    const = lambda a: pl.BlockSpec(a.shape, lambda i: (0,) * a.ndim)

    out = pl.pallas_call(
        _actor_kernel,
        out_shape=jax.ShapeDtypeStruct((Bp, action_dim), jnp.float32),
        grid=(Bp // tb,),
        in_specs=[
            pl.BlockSpec(memory_space=pltpu.MemorySpace.SMEM),        # action_range scalar
            pl.BlockSpec((tb, state_dim), lambda i: (i, 0)),          # state tile
            const(w1), const(b1), const(w2), const(b2), const(w3), const(b3),
        ],
        out_specs=pl.BlockSpec((tb, action_dim), lambda i: (i, 0)),
        compiler_params=pltpu.CompilerParams(
            dimension_semantics=("parallel",)),                       # use both v7x TCs
    )(ar, x, w1, b1, w2, b2, w3, b3)

    return out[:B] if Bp != B else out


def init_actor_params(key, state_dim, action_dim):
    """Deterministic init mimicking nn.Linear's U(-1/sqrt(fan_in), 1/sqrt(fan_in))."""
    def linear(k, fan_in, fan_out):
        kw, kb = jax.random.split(k)
        bound = 1.0 / jnp.sqrt(float(fan_in))
        w = jax.random.uniform(kw, (fan_in, fan_out), jnp.float32, -bound, bound)
        b = jax.random.uniform(kb, (1, fan_out), jnp.float32, -bound, bound)
        return w, b

    k1, k2, k3 = jax.random.split(key, 3)
    w1, b1 = linear(k1, state_dim, 16)
    w2, b2 = linear(k2, 16, 16)
    w3, b3 = linear(k3, 16, action_dim)
    return {"w1": w1, "b1": b1, "w2": w2, "b2": b2, "w3": w3, "b3": b3}


def actor_forward_ref(state, params, action_range):
    h = jnp.maximum(state @ params["w1"] + params["b1"], 0.0)
    h = jnp.maximum(h @ params["w2"] + params["b2"], 0.0)
    return jnp.tanh(h @ params["w3"] + params["b3"]) * action_range


if __name__ == "__main__":
    key = jax.random.PRNGKey(0)
    k_params, k_small, k_big = jax.random.split(key, 3)

    state_dim, action_dim = 4, 2
    action_range = 2.0
    params = init_actor_params(k_params, state_dim, action_dim)

    # Small batch (matches the test's usage): single grid step.
    state_small = jax.random.normal(k_small, (8, state_dim), jnp.float32)
    out_small = jax.block_until_ready(actor_forward(state_small, params, action_range))
    ref_small = actor_forward_ref(state_small, params, action_range)
    assert out_small.shape == (8, action_dim)
    assert jnp.allclose(out_small, ref_small, atol=1e-5, rtol=1e-5), "small-batch mismatch"

    # Larger, non-tile-aligned batch: exercises the grid, padding, and parallel axis.
    state_big = jax.random.normal(k_big, (1040, state_dim), jnp.float32)
    out_big = jax.block_until_ready(actor_forward(state_big, params, action_range))
    ref_big = actor_forward_ref(state_big, params, action_range)
    assert out_big.shape == (1040, action_dim)
    assert jnp.allclose(out_big, ref_big, atol=1e-5, rtol=1e-5), "big-batch mismatch"

    print("KERNEL_OK")
</pallas_src>

<mosaic_0001>
module attributes {stable_mosaic.version = 11 : i64} {
  func.func @_actor_kernel(%arg0: i32, %arg1: memref<1x1xf32, #tpu.memory_space<smem>>, %arg2: memref<8x4xf32, #tpu.memory_space<vmem>>, %arg3: memref<4x16xf32, #tpu.memory_space<vmem>>, %arg4: memref<1x16xf32, #tpu.memory_space<vmem>>, %arg5: memref<16x16xf32, #tpu.memory_space<vmem>>, %arg6: memref<1x16xf32, #tpu.memory_space<vmem>>, %arg7: memref<16x2xf32, #tpu.memory_space<vmem>>, %arg8: memref<1x2xf32, #tpu.memory_space<vmem>>, %arg9: memref<8x2xf32, #tpu.memory_space<vmem>>) attributes {dimension_semantics = [#tpu.dimension_semantics<parallel>], iteration_bounds = array<i64: 1>, scalar_prefetch = 0 : i64, scratch_operands = 0 : i64, tpu.core_type = #tpu.core_type<tc>, window_params = [{transform_indices = @transform_0, window_bounds = array<i64: 1, 1>}, {transform_indices = @transform_1, window_bounds = array<i64: 8, 4>}, {pipeline_mode = #tpu.pipeline_mode<synchronous>, transform_indices = @transform_2, window_bounds = array<i64: 4, 16>}, {pipeline_mode = #tpu.pipeline_mode<synchronous>, transform_indices = @transform_3, window_bounds = array<i64: 1, 16>}, {pipeline_mode = #tpu.pipeline_mode<synchronous>, transform_indices = @transform_4, window_bounds = array<i64: 16, 16>}, {pipeline_mode = #tpu.pipeline_mode<synchronous>, transform_indices = @transform_5, window_bounds = array<i64: 1, 16>}, {pipeline_mode = #tpu.pipeline_mode<synchronous>, transform_indices = @transform_6, window_bounds = array<i64: 16, 2>}, {pipeline_mode = #tpu.pipeline_mode<synchronous>, transform_indices = @transform_7, window_bounds = array<i64: 1, 2>}, {transform_indices = @transform_8, window_bounds = array<i64: 8, 2>}]} {
    %c0 = arith.constant 0 : index
    %c0_0 = arith.constant 0 : index
    %0 = vector.load %arg2[%c0, %c0_0] : memref<8x4xf32, #tpu.memory_space<vmem>>, vector<8x4xf32>
    %c0_1 = arith.constant 0 : index
    %c0_2 = arith.constant 0 : index
    %1 = vector.load %arg3[%c0_1, %c0_2] : memref<4x16xf32, #tpu.memory_space<vmem>>, vector<4x16xf32>
    %cst = arith.constant dense<0.000000e+00> : vector<8x16xf32>
    %2 = tpu.matmul %0, %1, %cst {dimension_numbers = #tpu.dot_dimension_numbers<[1], [0], [0], [1], [0, 0, 1, 1], [], []>} : vector<8x4xf32>, vector<4x16xf32>, vector<8x16xf32> -> vector<8x16xf32>
    %c0_3 = arith.constant 0 : index
    %c0_4 = arith.constant 0 : index
    %3 = vector.load %arg4[%c0_3, %c0_4] : memref<1x16xf32, #tpu.memory_space<vmem>>, vector<1x16xf32>
    %4 = vector.broadcast %3 : vector<1x16xf32> to vector<8x16xf32>
    %5 = arith.addf %2, %4 : vector<8x16xf32>
    %cst_5 = arith.constant 0.000000e+00 : f32
    %6 = vector.broadcast %cst_5 : f32 to vector<8x16xf32>
    %7 = arith.maximumf %5, %6 : vector<8x16xf32>
    %c0_6 = arith.constant 0 : index
    %c0_7 = arith.constant 0 : index
    %8 = vector.load %arg5[%c0_6, %c0_7] : memref<16x16xf32, #tpu.memory_space<vmem>>, vector<16x16xf32>
    %cst_8 = arith.constant dense<0.000000e+00> : vector<8x16xf32>
    %9 = tpu.matmul %7, %8, %cst_8 {dimension_numbers = #tpu.dot_dimension_numbers<[1], [0], [0], [1], [0, 0, 1, 1], [], []>} : vector<8x16xf32>, vector<16x16xf32>, vector<8x16xf32> -> vector<8x16xf32>
    %c0_9 = arith.constant 0 : index
    %c0_10 = arith.constant 0 : index
    %10 = vector.load %arg6[%c0_9, %c0_10] : memref<1x16xf32, #tpu.memory_space<vmem>>, vector<1x16xf32>
    %11 = vector.broadcast %10 : vector<1x16xf32> to vector<8x16xf32>
    %12 = arith.addf %9, %11 : vector<8x16xf32>
    %cst_11 = arith.constant 0.000000e+00 : f32
    %13 = vector.broadcast %cst_11 : f32 to vector<8x16xf32>
    %14 = arith.maximumf %12, %13 : vector<8x16xf32>
    %c0_12 = arith.constant 0 : index
    %c0_13 = arith.constant 0 : index
    %15 = vector.load %arg7[%c0_12, %c0_13] : memref<16x2xf32, #tpu.memory_space<vmem>>, vector<16x2xf32>
    %cst_14 = arith.constant dense<0.000000e+00> : vector<8x2xf32>
    %16 = tpu.matmul %14, %15, %cst_14 {dimension_numbers = #tpu.dot_dimension_numbers<[1], [0], [0], [1], [0, 0, 1, 1], [], []>} : vector<8x16xf32>, vector<16x2xf32>, vector<8x2xf32> -> vector<8x2xf32>
    %c0_15 = arith.constant 0 : index
    %c0_16 = arith.constant 0 : index
    %17 = vector.load %arg8[%c0_15, %c0_16] : memref<1x2xf32, #tpu.memory_space<vmem>>, vector<1x2xf32>
    %18 = vector.broadcast %17 : vector<1x2xf32> to vector<8x2xf32>
    %19 = arith.addf %16, %18 : vector<8x2xf32>
    %20 = math.tanh %19 : vector<8x2xf32>
    %c0_17 = arith.constant 0 : index
    %c0_18 = arith.constant 0 : index
    %21 = memref.load %arg1[%c0_17, %c0_18] : memref<1x1xf32, #tpu.memory_space<smem>>
    %22 = vector.broadcast %21 : f32 to vector<8x2xf32>
    %23 = arith.mulf %20, %22 : vector<8x2xf32>
    %c0_19 = arith.constant 0 : index
    %c0_20 = arith.constant 0 : index
    %24 = vector.load %arg9[%c0_19, %c0_20] : memref<8x2xf32, #tpu.memory_space<vmem>>, vector<8x2xf32>
    tpu.vector_store %arg9[%c0_19, %c0_20], %23 {strides = array<i32>} : memref<8x2xf32, #tpu.memory_space<vmem>>, vector<8x2xf32>,
    return
  }
  func.func @transform_0(%arg0: i32) -> (i32, i32) {
    %c0_i32 = arith.constant 0 : i32
    %c0_i32_0 = arith.constant 0 : i32
    %c0_i32_1 = arith.constant 0 : i32
    return %c0_i32, %c0_i32_0 : i32, i32
  }
  func.func @transform_1(%arg0: i32) -> (i32, i32) {
    %c0_i32 = arith.constant 0 : i32
    %c0_i32_0 = arith.constant 0 : i32
    return %arg0, %c0_i32 : i32, i32
  }
  func.func @transform_2(%arg0: i32) -> (i32, i32) {
    %c0_i32 = arith.constant 0 : i32
    %c0_i32_0 = arith.constant 0 : i32
    %c0_i32_1 = arith.constant 0 : i32
    return %c0_i32, %c0_i32_0 : i32, i32
  }
  func.func @transform_3(%arg0: i32) -> (i32, i32) {
    %c0_i32 = arith.constant 0 : i32
    %c0_i32_0 = arith.constant 0 : i32
    %c0_i32_1 = arith.constant 0 : i32
    return %c0_i32, %c0_i32_0 : i32, i32
  }
  func.func @transform_4(%arg0: i32) -> (i32, i32) {
    %c0_i32 = arith.constant 0 : i32
    %c0_i32_0 = arith.constant 0 : i32
    %c0_i32_1 = arith.constant 0 : i32
    return %c0_i32, %c0_i32_0 : i32, i32
  }
  func.func @transform_5(%arg0: i32) -> (i32, i32) {
    %c0_i32 = arith.constant 0 : i32
    %c0_i32_0 = arith.constant 0 : i32
    %c0_i32_1 = arith.constant 0 : i32
    return %c0_i32, %c0_i32_0 : i32, i32
  }
  func.func @transform_6(%arg0: i32) -> (i32, i32) {
    %c0_i32 = arith.constant 0 : i32
    %c0_i32_0 = arith.constant 0 : i32
    %c0_i32_1 = arith.constant 0 : i32
    return %c0_i32, %c0_i32_0 : i32, i32
  }
  func.func @transform_7(%arg0: i32) -> (i32, i32) {
    %c0_i32 = arith.constant 0 : i32
    %c0_i32_0 = arith.constant 0 : i32
    %c0_i32_1 = arith.constant 0 : i32
    return %c0_i32, %c0_i32_0 : i32, i32
  }
  func.func @transform_8(%arg0: i32) -> (i32, i32) {
    %c0_i32 = arith.constant 0 : i32
    %c0_i32_0 = arith.constant 0 : i32
    return %arg0, %c0_i32 : i32, i32
  }
}

</mosaic_0001>

<llo_original>
// kernel: tpu_custom_call.1
$region0: #{tpu_custom_call.1}
  #allocation0 [shape = 'u32[]', space=smem, size = 0x4, offset = 0x4, fixed_abs, tag = 'smem constant byte address 0x4 - core index']
  #allocation1 [shape = 'u32[144,128]{1,0:T(1,128)}', space=vmem, size = 0x12000, scoped, tag = 'internal scratch']
  #allocation2 [shape = 'f32[1,1]{1,0:T(1,128)S(6)}', space=smem, size = 0x200, scoped, tag = 'scoped memory for tpu_custom_call.1']
  %s0 = inlined_call_operand.<no memory space> [shape: f32[1,1], index: 0, kind: input, shape index: {}]
  %s1 = inlined_call_operand.vmem [shape: f32[8,4], index: 1, kind: input, shape index: {}]
  %s2 = inlined_call_operand.vmem [shape: f32[4,16], index: 2, kind: input, shape index: {}]
  %s3 = inlined_call_operand.vmem [shape: f32[1,16], index: 3, kind: input, shape index: {}]
  %s4 = inlined_call_operand.vmem [shape: f32[16,16], index: 4, kind: input, shape index: {}]
  %s5 = inlined_call_operand.vmem [shape: f32[1,16], index: 5, kind: input, shape index: {}]
  %s6 = inlined_call_operand.vmem [shape: f32[16,2], index: 6, kind: input, shape index: {}]
  %s7 = inlined_call_operand.vmem [shape: f32[1,2], index: 7, kind: input, shape index: {}]
  %s8 = inlined_call_operand.vmem [shape: f32[8,2], index: 8, kind: output, shape index: {}]
  %s9 = sld [smem:[#allocation0]]
  $region42: #{tpu_custom_call.1} parent=0
    _
  %s11 = ssub.s32 1, %s9
  %s12 = scalar_select 0, %s11, %s9
  %13 = sst [smem:[#allocation2]] %s0
  // Predicated region
  $region2: #{tpu_custom_call.1} parent=0 // pred_check
    _
  $region3: #{tpu_custom_call.1} parent=0 // pred_check_branch
    %15 = sbr.rel (0) target = $region5
  $region4: #{tpu_custom_call.1} parent=0 // pred_region
    _
  $region5: #{tpu_custom_call.1} parent=0 // pred_fallthru
    _
  // Predicated region
  $region6: #{tpu_custom_call.1} parent=0 // pred_check
    _
  $region7: #{tpu_custom_call.1} parent=0 // pred_check_branch
    %17 = sbr.rel (0) target = $region9
  $region8: #{tpu_custom_call.1} parent=0 // pred_region
    _
  $region9: #{tpu_custom_call.1} parent=0 // pred_fallthru
    _
  // Predicated region
  $region10: #{tpu_custom_call.1} parent=0 // pred_check
    _
  $region11: #{tpu_custom_call.1} parent=0 // pred_check_branch
    %19 = sbr.rel (0) target = $region13
  $region12: #{tpu_custom_call.1} parent=0 // pred_region
    _
  $region13: #{tpu_custom_call.1} parent=0 // pred_fallthru
    _
  // Predicated region
  $region14: #{tpu_custom_call.1} parent=0 // pred_check
    _
  $region15: #{tpu_custom_call.1} parent=0 // pred_check_branch
    %21 = sbr.rel (0) target = $region17
  $region16: #{tpu_custom_call.1} parent=0 // pred_region
    _
  $region17: #{tpu_custom_call.1} parent=0 // pred_fallthru
    _
  // Predicated region
  $region18: #{tpu_custom_call.1} parent=0 // pred_check
    _
  $region19: #{tpu_custom_call.1} parent=0 // pred_check_branch
    %23 = sbr.rel (0) target = $region21
  $region20: #{tpu_custom_call.1} parent=0 // pred_region
    _
  $region21: #{tpu_custom_call.1} parent=0 // pred_fallthru
    _
  // Predicated region
  $region22: #{tpu_custom_call.1} parent=0 // pred_check
    _
  $region23: #{tpu_custom_call.1} parent=0 // pred_check_branch
    %25 = sbr.rel (0) target = $region25
  $region24: #{tpu_custom_call.1} parent=0 // pred_region
    _
  $region25: #{tpu_custom_call.1} parent=0 // pred_fallthru
    _
  // Predicated region
  $region26: #{tpu_custom_call.1} parent=0 // pred_check
    _
  $region27: #{tpu_custom_call.1} parent=0 // pred_check_branch
    %27 = sbr.rel (0) target = $region29
  $region28: #{tpu_custom_call.1} parent=0 // pred_region
    _
  $region29: #{tpu_custom_call.1} parent=0 // pred_fallthru
    _
  // Predicated region
  $region30: #{tpu_custom_call.1} parent=0 // pred_check
    _
  $region31: #{tpu_custom_call.1} parent=0 // pred_check_branch
    %29 = sbr.rel (0) target = $region33
  $region32: #{tpu_custom_call.1} parent=0 // pred_region
    _
  $region33: #{tpu_custom_call.1} parent=0 // pred_fallthru
    _
  %v30 = vld [vmem:[%s1] sm:$0xff]
  %v31 = vld [vmem:[%s2] sm:$0xf]
  %v32 = vld [vmem:[%s3] sm:$0x1]
  %v34 = vlaneseq
  %v35 = vshrl.u32 %v34, 7
  %v36 = vsub.s32 0, %v35
  %v37 = vrot.slane %v32, %v36
  %vm39 = vcmask 31744
  %v41 = vsel %vm39, %v30, 0
  %vm43 = vcmask 1043456
  %v45 = vsel %vm43, %v31, 0
  %47 = vmatprep.subr.mxu0 0.0
  %48 = vmatpush1.msra.mxu0 0.0
  %49 = vmatprep.subr.mxu0 0.0
  %50 = vmatpush1.msra.mxu0 0.0
  %51 = vmatprep.subr.mxu0 0.0
  %52 = vmatpush1.msra.mxu0 0.0
  %53 = vmatprep.subr.mxu0 0.0
  %54 = vmatpush1.msra.mxu0 0.0
  %55 = vmatprep.subr.mxu0 0.0
  %56 = vmatpush1.msra.mxu0 0.0
  %57 = vmatprep.subr.mxu0 0.0
  %58 = vmatpush1.msra.mxu0 0.0
  %59 = vmatprep.subr.mxu0 0.0
  %60 = vmatpush1.msra.mxu0 0.0
  %61 = vmatprep.subr.mxu0 0.0
  %62 = vmatpush1.msra.mxu0 0.0
  %63 = vmatprep.subr.mxu0 0.0
  %64 = vmatpush1.msra.mxu0 0.0
  %65 = vmatprep.subr.mxu0 0.0
  %66 = vmatpush1.msra.mxu0 0.0
  %67 = vmatprep.subr.mxu0 0.0
  %68 = vmatpush1.msra.mxu0 0.0
  %69 = vmatprep.subr.mxu0 0.0
  %70 = vmatpush1.msra.mxu0 0.0
  %71 = vmatprep.subr.mxu0 0.0
  %72 = vmatpush1.msra.mxu0 0.0
  %73 = vmatprep.subr.mxu0 0.0
  %74 = vmatpush1.msra.mxu0 0.0
  %75 = vmatprep.subr.mxu0 0.0
  %76 = vmatpush1.msra.mxu0 0.0
  %77 = vmatprep.subr.mxu0 0.0
  %78 = vmatpush1.msra.mxu0 %v45
  %79 = vmatprep.subr.mxu0 0.0
  %80 = vmatpush2.msra.mxu0 0.0
  %81 = vmatprep.subr.mxu0 0.0
  %82 = vmatpush2.msra.mxu0 0.0
  %83 = vmatprep.subr.mxu0 0.0
  %84 = vmatpush2.msra.mxu0 0.0
  %85 = vmatprep.subr.mxu0 0.0
  %86 = vmatpush2.msra.mxu0 0.0
  %87 = vmatprep.subr.mxu0 0.0
  %88 = vmatpush2.msra.mxu0 0.0
  %89 = vmatprep.subr.mxu0 0.0
  %90 = vmatpush2.msra.mxu0 0.0
  %91 = vmatprep.subr.mxu0 0.0
  %92 = vmatpush2.msra.mxu0 0.0
  %93 = vmatprep.subr.mxu0 0.0
  %94 = vmatpush2.msra.mxu0 0.0
  %95 = vmatprep.subr.mxu0 0.0
  %96 = vmatpush2.msra.mxu0 0.0
  %97 = vmatprep.subr.mxu0 0.0
  %98 = vmatpush2.msra.mxu0 0.0
  %99 = vmatprep.subr.mxu0 0.0
  %100 = vmatpush2.msra.mxu0 0.0
  %101 = vmatprep.subr.mxu0 0.0
  %102 = vmatpush2.msra.mxu0 0.0
  %103 = vmatprep.subr.mxu0 0.0
  %104 = vmatpush2.msra.mxu0 0.0
  %105 = vmatprep.subr.mxu0 0.0
  %106 = vmatpush2.msra.mxu0 0.0
  %107 = vmatprep.subr.mxu0 0.0
  %108 = vmatpush2.msra.mxu0 0.0
  %109 = vmatprep.subr.mxu0 0.0
  %110 = vmatpush2.msra.mxu0 0.0
  %111 = vmatprep.mubr.f32.mxu0 0.0
  %112 = vmatmul.mubr.f32.gmra.mxu0 %v41
  %v113 = vpop.f32.mrf.mxu0
  %v114 = vadd.f32 %v37, %v113
  %v115 = vpop.f32.mrf.mxu0
  %116 = vdwg.mxu0
  %v117 = vmax.f32 %v114, 0.0
  %v118 = vld [vmem:[%s4] sm:$0xff]
  %v119 = vld [vmem:[%s4 + $0x8] sm:$0xff]
  %v120 = vld [vmem:[%s5] sm:$0x1]
  %v122 = vlaneseq
  %v123 = vshrl.u32 %v122, 7
  %v124 = vsub.s32 0, %v123
  %v125 = vrot.slane %v120, %v124
  %vm127 = vcmask 130048
  %v129 = vsel %vm127, %v117, 0
  %131 = vmatprep.subr.mxu0 0.0
  %132 = vmatpush1.msra.mxu0 0.0
  %133 = vmatprep.subr.mxu0 0.0
  %134 = vmatpush1.msra.mxu0 0.0
  %135 = vmatprep.subr.mxu0 0.0
  %136 = vmatpush1.msra.mxu0 0.0
  %137 = vmatprep.subr.mxu0 0.0
  %138 = vmatpush1.msra.mxu0 0.0
  %139 = vmatprep.subr.mxu0 0.0
  %140 = vmatpush1.msra.mxu0 0.0
  %141 = vmatprep.subr.mxu0 0.0
  %142 = vmatpush1.msra.mxu0 0.0
  %143 = vmatprep.subr.mxu0 0.0
  %144 = vmatpush1.msra.mxu0 0.0
  %145 = vmatprep.subr.mxu0 0.0
  %146 = vmatpush1.msra.mxu0 0.0
  %147 = vmatprep.subr.mxu0 0.0
  %148 = vmatpush1.msra.mxu0 0.0
  %149 = vmatprep.subr.mxu0 0.0
  %150 = vmatpush1.msra.mxu0 0.0
  %151 = vmatprep.subr.mxu0 0.0
  %152 = vmatpush1.msra.mxu0 0.0
  %153 = vmatprep.subr.mxu0 0.0
  %154 = vmatpush1.msra.mxu0 0.0
  %155 = vmatprep.subr.mxu0 0.0
  %156 = vmatpush1.msra.mxu0 0.0
  %157 = vmatprep.subr.mxu0 0.0
  %158 = vmatpush1.msra.mxu0 0.0
  %159 = vmatprep.subr.mxu0 0.0
  %160 = vmatpush1.msra.mxu0 %v119
  %161 = vmatprep.subr.mxu0 0.0
  %162 = vmatpush1.msra.mxu0 %v118
  %163 = vmatprep.subr.mxu0 0.0
  %164 = vmatpush2.msra.mxu0 0.0
  %165 = vmatprep.subr.mxu0 0.0
  %166 = vmatpush2.msra.mxu0 0.0
  %167 = vmatprep.subr.mxu0 0.0
  %168 = vmatpush2.msra.mxu0 0.0
  %169 = vmatprep.subr.mxu0 0.0
  %170 = vmatpush2.msra.mxu0 0.0
  %171 = vmatprep.subr.mxu0 0.0
  %172 = vmatpush2.msra.mxu0 0.0
  %173 = vmatprep.subr.mxu0 0.0
  %174 = vmatpush2.msra.mxu0 0.0
  %175 = vmatprep.subr.mxu0 0.0
  %176 = vmatpush2.msra.mxu0 0.0
  %177 = vmatprep.subr.mxu0 0.0
  %178 = vmatpush2.msra.mxu0 0.0
  %179 = vmatprep.subr.mxu0 0.0
  %180 = vmatpush2.msra.mxu0 0.0
  %181 = vmatprep.subr.mxu0 0.0
  %182 = vmatpush2.msra.mxu0 0.0
  %183 = vmatprep.subr.mxu0 0.0
  %184 = vmatpush2.msra.mxu0 0.0
  %185 = vmatprep.subr.mxu0 0.0
  %186 = vmatpush2.msra.mxu0 0.0
  %187 = vmatprep.subr.mxu0 0.0
  %188 = vmatpush2.msra.mxu0 0.0
  %189 = vmatprep.subr.mxu0 0.0
  %190 = vmatpush2.msra.mxu0 0.0
  %191 = vmatprep.subr.mxu0 0.0
  %192 = vmatpush2.msra.mxu0 0.0
  %193 = vmatprep.subr.mxu0 0.0
  %194 = vmatpush2.msra.mxu0 0.0
  %195 = vmatprep.mubr.f32.mxu0 0.0
  %196 = vmatmul.mubr.f32.gmra.mxu0 %v129
  %v197 = vpop.f32.mrf.mxu0
  %v198 = vadd.f32 %v125, %v197
  %v199 = vpop.f32.mrf.mxu0
  %200 = vdwg.mxu0
  %v201 = vmax.f32 %v198, 0.0
  %v202 = vld [vmem:[%s6] sm:$0xff]
  %v203 = vld [vmem:[%s6 + $0x8] sm:$0xff]
  %v204 = vld [vmem:[%s7] sm:$0x1]
  %v206 = vlaneseq
  %v207 = vshrl.u32 %v206, 7
  %v208 = vsub.s32 0, %v207
  %v209 = vrot.slane %v204, %v208
  %v212 = vsel %vm127, %v201, 0
  %214 = vmatprep.subr.mxu0 0.0
  %215 = vmatpush1.msra.mxu0 0.0
  %216 = vmatprep.subr.mxu0 0.0
  %217 = vmatpush1.msra.mxu0 0.0
  %218 = vmatprep.subr.mxu0 0.0
  %219 = vmatpush1.msra.mxu0 0.0
  %220 = vmatprep.subr.mxu0 0.0
  %221 = vmatpush1.msra.mxu0 0.0
  %222 = vmatprep.subr.mxu0 0.0
  %223 = vmatpush1.msra.mxu0 0.0
  %224 = vmatprep.subr.mxu0 0.0
  %225 = vmatpush1.msra.mxu0 0.0
  %226 = vmatprep.subr.mxu0 0.0
  %227 = vmatpush1.msra.mxu0 0.0
  %228 = vmatprep.subr.mxu0 0.0
  %229 = vmatpush1.msra.mxu0 0.0
  %230 = vmatprep.subr.mxu0 0.0
  %231 = vmatpush1.msra.mxu0 0.0
  %232 = vmatprep.subr.mxu0 0.0
  %233 = vmatpush1.msra.mxu0 0.0
  %234 = vmatprep.subr.mxu0 0.0
  %235 = vmatpush1.msra.mxu0 0.0
  %236 = vmatprep.subr.mxu0 0.0
  %237 = vmatpush1.msra.mxu0 0.0
  %238 = vmatprep.subr.mxu0 0.0
  %239 = vmatpush1.msra.mxu0 0.0
  %240 = vmatprep.subr.mxu0 0.0
  %241 = vmatpush1.msra.mxu0 0.0
  %242 = vmatprep.subr.mxu0 0.0
  %243 = vmatpush1.msra.mxu0 %v203
  %244 = vmatprep.subr.mxu0 0.0
  %245 = vmatpush1.msra.mxu0 %v202
  %246 = vmatprep.subr.mxu0 0.0
  %247 = vmatpush2.msra.mxu0 0.0
  %248 = vmatprep.subr.mxu0 0.0
  %249 = vmatpush2.msra.mxu0 0.0
  %250 = vmatprep.subr.mxu0 0.0
  %251 = vmatpush2.msra.mxu0 0.0
  %252 = vmatprep.subr.mxu0 0.0
  %253 = vmatpush2.msra.mxu0 0.0
  %254 = vmatprep.subr.mxu0 0.0
  %255 = vmatpush2.msra.mxu0 0.0
  %256 = vmatprep.subr.mxu0 0.0
  %257 = vmatpush2.msra.mxu0 0.0
  %258 = vmatprep.subr.mxu0 0.0
  %259 = vmatpush2.msra.mxu0 0.0
  %260 = vmatprep.subr.mxu0 0.0
  %261 = vmatpush2.msra.mxu0 0.0
  %262 = vmatprep.subr.mxu0 0.0
  %263 = vmatpush2.msra.mxu0 0.0
  %264 = vmatprep.subr.mxu0 0.0
  %265 = vmatpush2.msra.mxu0 0.0
  %266 = vmatprep.subr.mxu0 0.0
  %267 = vmatpush2.msra.mxu0 0.0
  %268 = vmatprep.subr.mxu0 0.0
  %269 = vmatpush2.msra.mxu0 0.0
  %270 = vmatprep.subr.mxu0 0.0
  %271 = vmatpush2.msra.mxu0 0.0
  %272 = vmatprep.subr.mxu0 0.0
  %273 = vmatpush2.msra.mxu0 0.0
  %274 = vmatprep.subr.mxu0 0.0
  %275 = vmatpush2.msra.mxu0 0.0
  %276 = vmatprep.subr.mxu0 0.0
  %277 = vmatpush2.msra.mxu0 0.0
  %278 = vmatprep.mubr.f32.mxu0 0.0
  %279 = vmatmul.mubr.f32.gmra.mxu0 %v212
  %v280 = vpop.f32.mrf.mxu0
  %v281 = vadd.f32 %v209, %v280
  %v282 = vpop.f32.mrf.mxu0
  %283 = vdwg.mxu0
  %v284 = vtanh.pop %v281
  %s285 = sld [smem:[#allocation2]]
  %v286 = vstv %s285
  %v287 = vmul.f32 %v284, %v286
  %vm288 = vcmask 15360
  %289 = vst.msk [vmem:[%s8] sm:$0xff] %vm288, %v287
  // Predicated region
  $region34: #{tpu_custom_call.1} parent=0 // pred_check
    _
  $region35: #{tpu_custom_call.1} parent=0 // pred_check_branch
    %291 = sbr.rel (0) target = $region37
  $region36: #{tpu_custom_call.1} parent=0 // pred_region
    _
  $region37: #{tpu_custom_call.1} parent=0 // pred_fallthru
    _
  // Predicated region
  $region38: #{tpu_custom_call.1} parent=0 // pred_check
    _
  $region39: #{tpu_custom_call.1} parent=0 // pred_check_branch
    %293 = sbr.rel (0) target = $region41
  $region40: #{tpu_custom_call.1} parent=0 // pred_region
    _
  $region41: #{tpu_custom_call.1} parent=0 // pred_fallthru
    _

</llo_original>
